<compile_context>
chip_gen: v6e
topology: v6e:2x2x1
jax: 0.10.0
libtpu: 0.0.40
codegen_flags: <defaults>
</compile_context>

<pallas_src>
import jax
import jax.numpy as jnp
from jax.experimental import pallas as pl
from jax.experimental.pallas import tpu as pltpu


def fused_classifier_kernel(x_ref, w_ref, b_ref, o_ref):
    # [TILE_B, D_in] (bf16) @ [D_in, N_pad] (bf16) on the MXU, f32 accumulation.
    acc = jnp.dot(x_ref[...], w_ref[...], preferred_element_type=jnp.float32)
    nc = o_ref.shape[-1]
    # Keep the lane-padded accumulator in VMEM; store only the real n_classes
    # columns (narrow masked store instead of a padded HBM slab + XLA slice).
    o_ref[...] = (acc[:, :nc] + b_ref[...]).astype(o_ref.dtype)


def prepare_classifier_params(w1, b1, w2, b2, param_dtype=jnp.bfloat16):
    """One-time parameter transform; keep the results as the stored params.

    w1: [input_dim, fc_dim]   b1: [fc_dim]
    w2: [fc_dim, n_classes]   b2: [n_classes]
    Returns (w_fused [input_dim, n_pad] in param_dtype, b_fused [1, n_classes] f32).
    """
    input_dim, fc_dim = w1.shape
    n_classes = w2.shape[1]
    # Keep n_pad at the minimal 128-lane multiple (HBM-bound kernel; wider
    # padding would only add output/weight bytes).
    n_pad = max(128, pl.cdiv(n_classes, 128) * 128)

    hi = jax.lax.Precision.HIGHEST  # one-time fusion stays in full f32
    w2_p = (
        jnp.zeros((fc_dim, n_pad), jnp.float32)
        .at[:, :n_classes]
        .set(w2.astype(jnp.float32))
    )
    w_fused = jnp.dot(w1.astype(jnp.float32), w2_p, precision=hi).astype(param_dtype)
    b_fused = (
        jnp.dot(b1.astype(jnp.float32).reshape(1, fc_dim),
                w2.astype(jnp.float32), precision=hi)
        + b2.astype(jnp.float32).reshape(1, n_classes)
    )  # bias kept in f32 (added to the f32 accumulator; negligible bytes)
    return w_fused, b_fused


def classifier_forward(features, w_fused, b_fused, tile_b=1024,
                       out_dtype=jnp.float32):
    """Hot path: features [B, input_dim] -> logits [B, n_classes]."""
    B, d_in = features.shape
    n_pad = w_fused.shape[1]
    n_classes = b_fused.shape[1]

    # Batch tile: multiple of 8 sublanes; cap so the grid has >=2 iterations
    # whenever B > 8 so both v7x TensorCores get work under "parallel".
    half_b = max(8, pl.cdiv(pl.cdiv(B, 2), 8) * 8)
    tile_b = max(8, min(tile_b, half_b))
    grid_b = pl.cdiv(B, tile_b)  # ragged last block handled by Pallas (no jnp.pad)

    compiler_kwargs = dict(dimension_semantics=("parallel",))
    # Double-buffered working-set estimate; raise the scoped-VMEM limit instead
    # of shrinking tiles if it would exceed v5e's 16 MiB default.
    vmem_est = (
        2 * tile_b * d_in * features.dtype.itemsize          # feature tiles
        + 2 * d_in * n_pad * w_fused.dtype.itemsize          # resident fused weight
        + 2 * tile_b * n_classes * jnp.dtype(out_dtype).itemsize  # output tiles
        + tile_b * n_pad * 4                                  # f32 accumulator value
        + (1 << 20)
    )
    if vmem_est > (12 << 20):
        compiler_kwargs["vmem_limit_bytes"] = int(min(2 * vmem_est, 100 << 20))

    return pl.pallas_call(
        fused_classifier_kernel,
        out_shape=jax.ShapeDtypeStruct((B, n_classes), out_dtype),
        grid=(grid_b,),
        in_specs=[
            pl.BlockSpec((tile_b, d_in), lambda i: (i, 0)),   # streamed per-B tile
            pl.BlockSpec((d_in, n_pad), lambda i: (0, 0)),    # VMEM-resident fused W
            pl.BlockSpec((1, n_classes), lambda i: (0, 0)),   # VMEM-resident fused b
        ],
        out_specs=pl.BlockSpec((tile_b, n_classes), lambda i: (i, 0)),
        compiler_params=pltpu.CompilerParams(**compiler_kwargs),
    )(features, w_fused, b_fused)


if __name__ == "__main__":
    # Config mimicking the PyTorch module with model_name='base': input_dim = emb_dim * 4
    config = {"b_size": 8, "emb_dim": 32, "fc_dim": 64, "n_classes": 3,
              "model_name": "base"}
    B = config["b_size"]
    input_dim = config["emb_dim"] * 4   # 128
    fc_dim = config["fc_dim"]
    n_classes = config["n_classes"]

    key = jax.random.PRNGKey(0)
    k_x, k_w1, k_b1, k_w2, k_b2 = jax.random.split(key, 5)

    features_f32 = jax.random.normal(k_x, (B, input_dim), dtype=jnp.float32)
    lim1 = 1.0 / (input_dim ** 0.5)
    w1 = jax.random.uniform(k_w1, (input_dim, fc_dim), jnp.float32, -lim1, lim1)
    b1 = jax.random.uniform(k_b1, (fc_dim,), jnp.float32, -lim1, lim1)
    lim2 = 1.0 / (fc_dim ** 0.5)
    w2 = jax.random.uniform(k_w2, (fc_dim, n_classes), jnp.float32, -lim2, lim2)
    b2 = jax.random.uniform(k_b2, (n_classes,), jnp.float32, -lim2, lim2)

    # One-time parameter fusion (f32) -> stored bf16 fused weight + f32 fused bias.
    w_fused, b_fused = jax.block_until_ready(
        prepare_classifier_params(w1, b1, w2, b2, param_dtype=jnp.bfloat16)
    )

    # Cast features to bf16 at the producer (stored activation dtype), not
    # inside classifier_forward, so it isn't an extra per-call HBM round trip.
    features = features_f32.astype(jnp.bfloat16)

    out = jax.block_until_ready(classifier_forward(features, w_fused, b_fused))
    assert out.shape == (B, n_classes)

    # Check 1: same-path reference (identical bf16 inputs, f32 accumulation).
    ref_same = (
        jnp.dot(features, w_fused, preferred_element_type=jnp.float32)[:, :n_classes]
        + b_fused
    )
    assert jnp.allclose(out, ref_same, atol=1e-4, rtol=1e-4), "mismatch vs same-path ref"

    # Check 2: original unfused two-Linear module in full f32 (loose tol for bf16 params).
    hi = jax.lax.Precision.HIGHEST
    ref_f32 = jnp.dot(jnp.dot(features_f32, w1, precision=hi) + b1, w2, precision=hi) + b2
    assert jnp.allclose(out, ref_f32, atol=5e-2, rtol=5e-2), "mismatch vs f32 module ref"

    # Also exercise the ragged last-block path (B not a multiple of tile_b).
    B2 = 20
    feats2_f32 = jax.random.normal(jax.random.PRNGKey(1), (B2, input_dim), jnp.float32)
    feats2 = feats2_f32.astype(jnp.bfloat16)
    out2 = jax.block_until_ready(classifier_forward(feats2, w_fused, b_fused))
    ref2 = (
        jnp.dot(feats2, w_fused, preferred_element_type=jnp.float32)[:, :n_classes]
        + b_fused
    )
    assert out2.shape == (B2, n_classes)
    assert jnp.allclose(out2, ref2, atol=1e-4, rtol=1e-4), "mismatch on ragged batch"

    print("KERNEL_OK")
</pallas_src>

<mosaic_0001>
module attributes {stable_mosaic.version = 11 : i64} {
  func.func @fused_classifier_kernel(%arg0: i32, %arg1: memref<8x128xbf16, #tpu.memory_space<vmem>>, %arg2: memref<128x128xbf16, #tpu.memory_space<vmem>>, %arg3: memref<1x3xf32, #tpu.memory_space<vmem>>, %arg4: memref<8x3xf32, #tpu.memory_space<vmem>>) attributes {dimension_semantics = [#tpu.dimension_semantics<parallel>], iteration_bounds = array<i64: 1>, scalar_prefetch = 0 : i64, scratch_operands = 0 : i64, tpu.core_type = #tpu.core_type<tc>, window_params = [{transform_indices = @transform_0, window_bounds = array<i64: 8, 128>}, {pipeline_mode = #tpu.pipeline_mode<synchronous>, transform_indices = @transform_1, window_bounds = array<i64: 128, 128>}, {pipeline_mode = #tpu.pipeline_mode<synchronous>, transform_indices = @transform_2, window_bounds = array<i64: 1, 3>}, {transform_indices = @transform_3, window_bounds = array<i64: 8, 3>}]} {
    %c0 = arith.constant 0 : index
    %c0_0 = arith.constant 0 : index
    %0 = vector.load %arg1[%c0, %c0_0] : memref<8x128xbf16, #tpu.memory_space<vmem>>, vector<8x128xbf16>
    %c0_1 = arith.constant 0 : index
    %c0_2 = arith.constant 0 : index
    %1 = vector.load %arg2[%c0_1, %c0_2] : memref<128x128xbf16, #tpu.memory_space<vmem>>, vector<128x128xbf16>
    %cst = arith.constant dense<0.000000e+00> : vector<8x128xf32>
    %2 = tpu.matmul %0, %1, %cst {dimension_numbers = #tpu.dot_dimension_numbers<[1], [0], [0], [1], [0, 0, 1, 1], [], []>} : vector<8x128xbf16>, vector<128x128xbf16>, vector<8x128xf32> -> vector<8x128xf32>
    %3 = vector.extract_strided_slice %2 {offsets = [0, 0], sizes = [8, 3], strides = [1, 1]} : vector<8x128xf32> to vector<8x3xf32>
    %c0_3 = arith.constant 0 : index
    %c0_4 = arith.constant 0 : index
    %4 = vector.load %arg3[%c0_3, %c0_4] : memref<1x3xf32, #tpu.memory_space<vmem>>, vector<1x3xf32>
    %5 = vector.broadcast %4 : vector<1x3xf32> to vector<8x3xf32>
    %6 = arith.addf %3, %5 : vector<8x3xf32>
    %c0_5 = arith.constant 0 : index
    %c0_6 = arith.constant 0 : index
    %7 = vector.load %arg4[%c0_5, %c0_6] : memref<8x3xf32, #tpu.memory_space<vmem>>, vector<8x3xf32>
    tpu.vector_store %arg4[%c0_5, %c0_6], %6 {strides = array<i32>} : memref<8x3xf32, #tpu.memory_space<vmem>>, vector<8x3xf32>,
    return
  }
  func.func @transform_0(%arg0: i32) -> (i32, i32) {
    %c0_i32 = arith.constant 0 : i32
    %c0_i32_0 = arith.constant 0 : i32
    return %arg0, %c0_i32 : i32, i32
  }
  func.func @transform_1(%arg0: i32) -> (i32, i32) {
    %c0_i32 = arith.constant 0 : i32
    %c0_i32_0 = arith.constant 0 : i32
    %c0_i32_1 = arith.constant 0 : i32
    return %c0_i32, %c0_i32_0 : i32, i32
  }
  func.func @transform_2(%arg0: i32) -> (i32, i32) {
    %c0_i32 = arith.constant 0 : i32
    %c0_i32_0 = arith.constant 0 : i32
    %c0_i32_1 = arith.constant 0 : i32
    return %c0_i32, %c0_i32_0 : i32, i32
  }
  func.func @transform_3(%arg0: i32) -> (i32, i32) {
    %c0_i32 = arith.constant 0 : i32
    %c0_i32_0 = arith.constant 0 : i32
    return %arg0, %c0_i32 : i32, i32
  }
}

</mosaic_0001>

<llo_original>
// kernel: tpu_custom_call.1
$region0: #{tpu_custom_call.1}
  #allocation0 [shape = 'u32[]', space=smem, size = 0x4, offset = 0x4, fixed_abs, tag = 'smem constant byte address 0x4 - core index']
  #allocation1 [shape = 'u32[144,128]{1,0:T(1,128)}', space=vmem, size = 0x12000, scoped, tag = 'internal scratch']
  %s0 = inlined_call_operand.hbm [shape: bf16[8,128], index: 0, kind: input, shape index: {}]
  %s1 = inlined_call_operand.hbm [shape: bf16[128,128], index: 1, kind: input, shape index: {}]
  %s2 = inlined_call_operand.vmem [shape: f32[1,3], index: 2, kind: input, shape index: {}]
  %s3 = inlined_call_operand.vmem [shape: f32[8,3], index: 3, kind: output, shape index: {}]
  %s4 = sld [smem:[#allocation0]]
  $region30: #{tpu_custom_call.1} parent=0
    _
  %s6 = ssub.s32 1, %s4
  %s7 = scalar_select 0, %s6, %s4
  $region1: #{tpu_custom_call.1} parent=0
    #allocation2 [shape = 'u8[2048]{0}', space=vmem, size = 0x800, scoped, tag = 'input window, operand 0, single buffered']
    #allocation3 [shape = 's32[1]{0}', space=sflag, size = 0x4, scoped, tag = 'scoped memory for tpu_custom_call.1']
    #allocation4 [shape = 'u8[32768]{0}', space=vmem, size = 0x8000, scoped, tag = 'input window, operand 1, single buffered']
    #allocation5 [shape = 's32[1]{0}', space=sflag, size = 0x4, scoped, tag = 'scoped memory for tpu_custom_call.1']
    %8 = vsyncpa [#allocation3], 0
    %9 = vsyncpa [#allocation5], 0
    // Predicated region
    $region2: #{tpu_custom_call.1} parent=1 // pred_check
      _
    $region3: #{tpu_custom_call.1} parent=1 // pred_check_branch
      %11 = sbr.rel (0) target = $region5
    $region4: #{tpu_custom_call.1} parent=1 // pred_region
      %s13 = ssub.s32 64, 64
      %14 = vsyncadd [#allocation3], %s13
      %s16 = sshll.u32 [#allocation2], 4
      %s17 = int_to_ptr.vmem [resolvable:$true] %s16
      %19 = dma.hbm_to_vmem [thread:$0]  %s0, 64, %s17, [#allocation3]
    $region5: #{tpu_custom_call.1} parent=1 // pred_fallthru
      _
    // Predicated region
    $region6: #{tpu_custom_call.1} parent=1 // pred_check
      _
    $region7: #{tpu_custom_call.1} parent=1 // pred_check_branch
      %21 = sbr.rel (0) target = $region9
    $region8: #{tpu_custom_call.1} parent=1 // pred_region
      %s23 = ssub.s32 1024, 1024
      %24 = vsyncadd [#allocation5], %s23
      %s25 = sshll.u32 [#allocation4], 4
      %s26 = int_to_ptr.vmem [resolvable:$true] %s25
      %31 = dma.hbm_to_vmem [thread:$0]  %s1, 1024, %s26, [#allocation5], 64, 64, 4
    $region9: #{tpu_custom_call.1} parent=1 // pred_fallthru
      _
    // Predicated region
    $region10: #{tpu_custom_call.1} parent=1 // pred_check
      _
    $region11: #{tpu_custom_call.1} parent=1 // pred_check_branch
      %33 = sbr.rel (0) target = $region13
    $region12: #{tpu_custom_call.1} parent=1 // pred_region
      _
    $region13: #{tpu_custom_call.1} parent=1 // pred_fallthru
      _
    // Predicated region
    $region14: #{tpu_custom_call.1} parent=1 // pred_check
      _
    $region15: #{tpu_custom_call.1} parent=1 // pred_check_branch
      %35 = sbr.rel (0) target = $region17
    $region16: #{tpu_custom_call.1} parent=1 // pred_region
      %36 = dma.done [#allocation3], 64
    $region17: #{tpu_custom_call.1} parent=1 // pred_fallthru
      _
    // Predicated region
    $region18: #{tpu_custom_call.1} parent=1 // pred_check
      _
    $region19: #{tpu_custom_call.1} parent=1 // pred_check_branch
      %38 = sbr.rel (0) target = $region21
    $region20: #{tpu_custom_call.1} parent=1 // pred_region
      %39 = dma.done [#allocation5], 1024
    $region21: #{tpu_custom_call.1} parent=1 // pred_fallthru
      _
    %v41 = vld [vmem:[#allocation2] sm:$0xf]
    %v42 = vld [vmem:[#allocation4] sm:$0xf]
    %v43 = vld [vmem:[#allocation4 + $0x4] sm:$0xf]
    %v44 = vld [vmem:[#allocation4 + $0x8] sm:$0xf]
    %v45 = vld [vmem:[#allocation4 + $0xc] sm:$0xf]
    %v46 = vld [vmem:[#allocation4 + $0x10] sm:$0xf]
    %v47 = vld [vmem:[#allocation4 + $0x14] sm:$0xf]
    %v48 = vld [vmem:[#allocation4 + $0x18] sm:$0xf]
    %v49 = vld [vmem:[#allocation4 + $0x1c] sm:$0xf]
    %v50 = vld [vmem:[#allocation4 + $0x20] sm:$0xf]
    %v51 = vld [vmem:[#allocation4 + $0x24] sm:$0xf]
    %v52 = vld [vmem:[#allocation4 + $0x28] sm:$0xf]
    %v53 = vld [vmem:[#allocation4 + $0x2c] sm:$0xf]
    %v54 = vld [vmem:[#allocation4 + $0x30] sm:$0xf]
    %v55 = vld [vmem:[#allocation4 + $0x34] sm:$0xf]
    %v56 = vld [vmem:[#allocation4 + $0x38] sm:$0xf]
    %v57 = vld [vmem:[#allocation4 + $0x3c] sm:$0xf]
    %v74 = vunpack.c.l.b16 %v42
    %v75 = vunpack.c.l.b16 %v43
    %v76 = vunpack.c.l.b16 %v44
    %v77 = vunpack.c.l.b16 %v45
    %v78 = vunpack.c.l.b16 %v46
    %v79 = vunpack.c.l.b16 %v47
    %v80 = vunpack.c.l.b16 %v48
    %v81 = vunpack.c.l.b16 %v49
    %v82 = vunpack.c.l.b16 %v50
    %v83 = vunpack.c.l.b16 %v51
    %v84 = vunpack.c.l.b16 %v52
    %v85 = vunpack.c.l.b16 %v53
    %v86 = vunpack.c.l.b16 %v54
    %v87 = vunpack.c.l.b16 %v55
    %v88 = vunpack.c.l.b16 %v56
    %v89 = vunpack.c.l.b16 %v57
    %v90 = vpack.c.b16 %v75, %v74
    %v91 = vpack.c.b16 %v77, %v76
    %v92 = vpack.c.b16 %v79, %v78
    %v93 = vpack.c.b16 %v81, %v80
    %v94 = vpack.c.b16 %v83, %v82
    %v95 = vpack.c.b16 %v85, %v84
    %v96 = vpack.c.b16 %v87, %v86
    %v97 = vpack.c.b16 %v89, %v88
    %106 = vmatprep.subr.bf16.mxu0 0
    %107 = vmatpush1.bf16.msra.mxu0 %v97
    %108 = vmatprep.subr.bf16.mxu0 0
    %109 = vmatpush1.bf16.msra.mxu0 %v96
    %110 = vmatprep.subr.bf16.mxu0 0
    %111 = vmatpush1.bf16.msra.mxu0 %v95
    %112 = vmatprep.subr.bf16.mxu0 0
    %113 = vmatpush1.bf16.msra.mxu0 %v94
    %114 = vmatprep.subr.bf16.mxu0 0
    %115 = vmatpush1.bf16.msra.mxu0 %v93
    %116 = vmatprep.subr.bf16.mxu0 0
    %117 = vmatpush1.bf16.msra.mxu0 %v92
    %118 = vmatprep.subr.bf16.mxu0 0
    %119 = vmatpush1.bf16.msra.mxu0 %v91
    %120 = vmatprep.subr.bf16.mxu0 0
    %121 = vmatpush1.bf16.msra.mxu0 %v90
    %122 = vmatprep.subr.bf16.mxu0 0
    %123 = vmatpush2.bf16.msra.mxu0 0
    %124 = vmatprep.subr.bf16.mxu0 0
    %125 = vmatpush2.bf16.msra.mxu0 0
    %126 = vmatprep.subr.bf16.mxu0 0
    %127 = vmatpush2.bf16.msra.mxu0 0
    %128 = vmatprep.subr.bf16.mxu0 0
    %129 = vmatpush2.bf16.msra.mxu0 0
    %130 = vmatprep.subr.bf16.mxu0 0
    %131 = vmatpush2.bf16.msra.mxu0 0
    %132 = vmatprep.subr.bf16.mxu0 0
    %133 = vmatpush2.bf16.msra.mxu0 0
    %134 = vmatprep.subr.bf16.mxu0 0
    %135 = vmatpush2.bf16.msra.mxu0 0
    %136 = vmatprep.subr.bf16.mxu0 0
    %137 = vmatpush2.bf16.msra.mxu0 0
    %138 = vmatprep.mubr.bf16.mxu0 0
    %139 = vmatmul.mubr.bf16.gmra.mxu0 %v41
    %v140 = vpop.f32.mrf.mxu0
    %v141 = vadd.f32 0.0, %v140
    %v142 = vpop.f32.mrf.mxu0
    %v143 = vpop.f32.mrf.mxu0
    %v144 = vpop.f32.mrf.mxu0
    %145 = vdwg.mxu0
    %v146 = vld [vmem:[%s2] sm:$0x1]
    %v148 = vlaneseq
    %v149 = vshrl.u32 %v148, 7
    %v150 = vsub.s32 0, %v149
    %v151 = vrot.slane %v146, %v150
    %v153 = vadd.f32 %v141, %v151
    %vm154 = vcmask 23552
    %155 = vst.msk [vmem:[%s3] sm:$0xff] %vm154, %v153
    // Predicated region
    $region22: #{tpu_custom_call.1} parent=1 // pred_check
      _
    $region23: #{tpu_custom_call.1} parent=1 // pred_check_branch
      %157 = sbr.rel (0) target = $region25
    $region24: #{tpu_custom_call.1} parent=1 // pred_region
      _
    $region25: #{tpu_custom_call.1} parent=1 // pred_fallthru
      _
    // Predicated region
    $region26: #{tpu_custom_call.1} parent=1 // pred_check
      _
    $region27: #{tpu_custom_call.1} parent=1 // pred_check_branch
      %159 = sbr.rel (0) target = $region29
    $region28: #{tpu_custom_call.1} parent=1 // pred_region
      _
    $region29: #{tpu_custom_call.1} parent=1 // pred_fallthru
      _
    %160 = vsyncpa [#allocation3], 1
    %161 = vsyncpa [#allocation5], 1

</llo_original>
